<compile_context>
chip_gen: v7x
topology: tpu7x:2x2x1
jax: 0.10.0
libtpu: 0.0.40
codegen_flags: <defaults>
</compile_context>

<pallas_src>
import jax
import jax.numpy as jnp
from jax import lax
from jax.experimental import pallas as pl
from jax.experimental.pallas import tpu as pltpu

# ---------------- configuration (matches TransH.__init__ semantics) ----------
NUM_ENTITIES = 32
NUM_RELATIONS = 8
EMBED_DIM = 32
BATCH = 8
MARGIN = 1.0
C_CONST = 0.1
_EPS = 1e-12  # F.normalize eps


# ---------------------------- Pallas kernel ----------------------------------
def transh_loss_kernel(idx_ref, ent_ref, rel_ref, nrm_ref, out_ref):
    # idx_ref rows: [positive triples ; negative triples]
    # idx_ref cols: 0 = head entity id, 1 = tail entity id, 2 = relation id
    two_b = idx_ref.shape[0]            # 2*B
    b = two_b // 2
    four_b = 2 * two_b
    E = ent_ref.shape[0]
    R = rel_ref.shape[0]

    idx = idx_ref[...]                  # [2B, 3] int32
    ent = ent_ref[...]                  # [E, D]
    rw = rel_ref[...]                   # [R, D]
    ww = nrm_ref[...]                   # [R, D]

    # ---- in-kernel embedding gather: one-hot x table on the MXU ------------
    ht_idx = jnp.concatenate([idx[:, 0:1], idx[:, 1:2]], axis=0)           # [4B, 1]
    r_idx = idx[:, 2:3]                                                    # [2B, 1]
    oh_ht = (ht_idx == lax.broadcasted_iota(jnp.int32, (four_b, E), 1)
             ).astype(jnp.float32)                                         # [4B, E]
    oh_r = (r_idx == lax.broadcasted_iota(jnp.int32, (two_b, R), 1)
            ).astype(jnp.float32)                                          # [2B, R]

    ht = jnp.dot(oh_ht, ent, preferred_element_type=jnp.float32)           # [4B, D] = [heads ; tails]
    rels = jnp.dot(oh_r, rw, preferred_element_type=jnp.float32)           # [2B, D]
    norms = jnp.dot(oh_r, ww, preferred_element_type=jnp.float32)          # [2B, D]

    # ---- shared L2 normalization of the hyperplane normals -----------------
    # v * rsqrt(max(||v||^2, eps^2)) == v / max(||v||, eps)   (F.normalize)
    n_sq = jnp.sum(norms * norms, axis=1, keepdims=True)                   # [2B, 1]
    n_hat = norms * lax.rsqrt(jnp.maximum(n_sq, _EPS * _EPS))              # [2B, D]
    n_hat2 = jnp.concatenate([n_hat, n_hat], axis=0)                       # [4B, D]

    # ---- hyperplane projection: ONE merged cross-lane reduction ------------
    dots = jnp.sum(ht * n_hat2, axis=1, keepdims=True)                     # [4B, 1]
    perp = ht - dots * n_hat2                                              # [4B, D]
    h_perp = perp[0:two_b, :]
    t_perp = perp[two_b:four_b, :]

    diff = h_perp + rels - t_perp                                          # [2B, D]
    score = jnp.sqrt(jnp.sum(diff * diff, axis=1, keepdims=True))          # [2B, 1]
    pos_score = score[0:b, :]
    neg_score = score[b:two_b, :]
    hinge = jnp.maximum(MARGIN + pos_score - neg_score, 0.0)               # [B, 1]
    basic_loss = jnp.sum(hinge) * (1.0 / b)

    # ---- orthogonality constraint: 3 reductions fused into 1 ---------------
    stk = jnp.concatenate([rw * ww, rw * rw, ww * ww], axis=0)             # [3R, D]
    sums = jnp.sum(stk, axis=1, keepdims=True)                             # [3R, 1]
    num = jnp.abs(sums[0:R, :])
    den = sums[R:2 * R, :] * sums[2 * R:3 * R, :]
    orth = jnp.sum(num * lax.rsqrt(den))

    out_ref[0, 0] = basic_loss + C_CONST * orth


# ------------------------------ wrapper ---------------------------------------
@jax.jit
def transh_forward(entity_w, relation_w, normal_w,
                   pos_h, pos_r, pos_t, neg_h, neg_r, neg_t):
    # Pack the six index vectors into one tiny [2B, 3] int32 operand; all the
    # actual gathering happens inside the kernel (one-hot MXU matmul), so the
    # only XLA-side work is this int32 stack — no [8B, D] HBM bounce and a
    # single kernel launch for the whole forward.
    idx = jnp.stack(
        [jnp.concatenate([pos_h, neg_h]),
         jnp.concatenate([pos_t, neg_t]),
         jnp.concatenate([pos_r, neg_r])],
        axis=1).astype(jnp.int32)                                  # [2B, 3]

    loss = pl.pallas_call(
        transh_loss_kernel,
        out_shape=jax.ShapeDtypeStruct((1, 1), jnp.float32),
        in_specs=[pl.BlockSpec(memory_space=pltpu.MemorySpace.VMEM),   # idx
                  pl.BlockSpec(memory_space=pltpu.MemorySpace.VMEM),   # entity table
                  pl.BlockSpec(memory_space=pltpu.MemorySpace.VMEM),   # relation table
                  pl.BlockSpec(memory_space=pltpu.MemorySpace.VMEM)],  # normal-vector table
        out_specs=pl.BlockSpec(memory_space=pltpu.MemorySpace.SMEM),   # scalar loss via SMEM
    )(idx, entity_w, relation_w, normal_w)
    return loss[0, 0]


# ------------------------- pure-JAX reference ----------------------------------
def transh_forward_ref(entity_w, relation_w, normal_w,
                       pos_h, pos_r, pos_t, neg_h, neg_r, neg_t):
    def l2n(v):
        return v / jnp.maximum(jnp.linalg.norm(v, axis=1, keepdims=True), _EPS)

    def transfer(e, norm):
        n = l2n(norm)
        return e - jnp.sum(e * n, axis=1, keepdims=True) * n

    ph, pt = entity_w[pos_h], entity_w[pos_t]
    pr, pn = relation_w[pos_r], normal_w[pos_r]
    nh, nt = entity_w[neg_h], entity_w[neg_t]
    nr, nnv = relation_w[neg_r], normal_w[neg_r]
    pos_score = jnp.linalg.norm(transfer(ph, pn) + pr - transfer(pt, pn), axis=1)
    neg_score = jnp.linalg.norm(transfer(nh, nnv) + nr - transfer(nt, nnv), axis=1)
    basic = jnp.mean(jnp.maximum(MARGIN + pos_score - neg_score, 0.0))
    dot = jnp.sum(relation_w * normal_w, axis=1)
    rn = jnp.linalg.norm(relation_w, axis=1)
    wn = jnp.linalg.norm(normal_w, axis=1)
    orth = jnp.sum(jnp.abs(dot / (rn * wn)))
    return basic + C_CONST * orth


# ----------------------- deterministic parameter init --------------------------
def xavier_uniform(key, shape):
    fan_out, fan_in = shape
    bound = jnp.sqrt(6.0 / (fan_in + fan_out))
    return jax.random.uniform(key, shape, jnp.float32, -bound, bound)


if __name__ == "__main__":
    key = jax.random.PRNGKey(0)
    k_e, k_r, k_n, k1, k2, k3, k4, k5, k6 = jax.random.split(key, 9)

    entity_w = xavier_uniform(k_e, (NUM_ENTITIES, EMBED_DIM))
    # entity embeddings are L2-normalized at init (as in the PyTorch module)
    entity_w = entity_w / jnp.maximum(
        jnp.linalg.norm(entity_w, axis=1, keepdims=True), _EPS)
    relation_w = xavier_uniform(k_r, (NUM_RELATIONS, EMBED_DIM))
    normal_w = xavier_uniform(k_n, (NUM_RELATIONS, EMBED_DIM))

    pos_h = jax.random.randint(k1, (BATCH,), 0, NUM_ENTITIES, jnp.int32)
    pos_r = jax.random.randint(k2, (BATCH,), 0, NUM_RELATIONS, jnp.int32)
    pos_t = jax.random.randint(k3, (BATCH,), 0, NUM_ENTITIES, jnp.int32)
    neg_h = jax.random.randint(k4, (BATCH,), 0, NUM_ENTITIES, jnp.int32)
    neg_r = jax.random.randint(k5, (BATCH,), 0, NUM_RELATIONS, jnp.int32)
    neg_t = jax.random.randint(k6, (BATCH,), 0, NUM_ENTITIES, jnp.int32)

    loss = jax.block_until_ready(
        transh_forward(entity_w, relation_w, normal_w,
                       pos_h, pos_r, pos_t, neg_h, neg_r, neg_t))
    ref = jax.block_until_ready(
        transh_forward_ref(entity_w, relation_w, normal_w,
                           pos_h, pos_r, pos_t, neg_h, neg_r, neg_t))

    assert jnp.allclose(loss, ref, rtol=1e-5, atol=1e-5), (loss, ref)
    print("KERNEL_OK")
</pallas_src>

<mosaic_0001>
module attributes {stable_mosaic.version = 11 : i64} {
  func.func @transh_loss_kernel(%arg0: memref<16x3xi32, #tpu.memory_space<vmem>>, %arg1: memref<32x32xf32, #tpu.memory_space<vmem>>, %arg2: memref<8x32xf32, #tpu.memory_space<vmem>>, %arg3: memref<8x32xf32, #tpu.memory_space<vmem>>, %arg4: memref<1x1xf32, #tpu.memory_space<smem>>) attributes {dimension_semantics = [], scalar_prefetch = 0 : i64, scratch_operands = 0 : i64, tpu.core_type = #tpu.core_type<tc>} {
    %c0 = arith.constant 0 : index
    %c0_0 = arith.constant 0 : index
    %0 = vector.load %arg0[%c0, %c0_0] : memref<16x3xi32, #tpu.memory_space<vmem>>, vector<16x3xi32>
    %c0_1 = arith.constant 0 : index
    %c0_2 = arith.constant 0 : index
    %1 = vector.load %arg1[%c0_1, %c0_2] : memref<32x32xf32, #tpu.memory_space<vmem>>, vector<32x32xf32>
    %c0_3 = arith.constant 0 : index
    %c0_4 = arith.constant 0 : index
    %2 = vector.load %arg2[%c0_3, %c0_4] : memref<8x32xf32, #tpu.memory_space<vmem>>, vector<8x32xf32>
    %c0_5 = arith.constant 0 : index
    %c0_6 = arith.constant 0 : index
    %3 = vector.load %arg3[%c0_5, %c0_6] : memref<8x32xf32, #tpu.memory_space<vmem>>, vector<8x32xf32>
    %4 = vector.extract_strided_slice %0 {offsets = [0, 0], sizes = [16, 1], strides = [1, 1]} : vector<16x3xi32> to vector<16x1xi32>
    %5 = vector.extract_strided_slice %0 {offsets = [0, 1], sizes = [16, 1], strides = [1, 1]} : vector<16x3xi32> to vector<16x1xi32>
    %6 = tpu.concatenate %4, %5 in 0 : vector<16x1xi32>, vector<16x1xi32> -> vector<32x1xi32>
    %7 = vector.extract_strided_slice %0 {offsets = [0, 2], sizes = [16, 1], strides = [1, 1]} : vector<16x3xi32> to vector<16x1xi32>
    %8 = tpu.iota {dimensions = array<i32: 1>} : vector<32x32xi32>
    %9 = vector.broadcast %6 : vector<32x1xi32> to vector<32x32xi32>
    %10 = arith.cmpi eq, %9, %8 : vector<32x32xi32>
    %11 = arith.extui %10 : vector<32x32xi1> to vector<32x32xi32>
    %12 = arith.sitofp %11 : vector<32x32xi32> to vector<32x32xf32>
    %13 = tpu.iota {dimensions = array<i32: 1>} : vector<16x8xi32>
    %14 = vector.broadcast %7 : vector<16x1xi32> to vector<16x8xi32>
    %15 = arith.cmpi eq, %14, %13 : vector<16x8xi32>
    %16 = arith.extui %15 : vector<16x8xi1> to vector<16x8xi32>
    %17 = arith.sitofp %16 : vector<16x8xi32> to vector<16x8xf32>
    %cst = arith.constant dense<0.000000e+00> : vector<32x32xf32>
    %18 = tpu.matmul %12, %1, %cst {dimension_numbers = #tpu.dot_dimension_numbers<[1], [0], [0], [1], [0, 0, 1, 1], [], []>} : vector<32x32xf32>, vector<32x32xf32>, vector<32x32xf32> -> vector<32x32xf32>
    %cst_7 = arith.constant dense<0.000000e+00> : vector<16x32xf32>
    %19 = tpu.matmul %17, %2, %cst_7 {dimension_numbers = #tpu.dot_dimension_numbers<[1], [0], [0], [1], [0, 0, 1, 1], [], []>} : vector<16x8xf32>, vector<8x32xf32>, vector<16x32xf32> -> vector<16x32xf32>
    %cst_8 = arith.constant dense<0.000000e+00> : vector<16x32xf32>
    %20 = tpu.matmul %17, %3, %cst_8 {dimension_numbers = #tpu.dot_dimension_numbers<[1], [0], [0], [1], [0, 0, 1, 1], [], []>} : vector<16x8xf32>, vector<8x32xf32>, vector<16x32xf32> -> vector<16x32xf32>
    %21 = arith.mulf %20, %20 : vector<16x32xf32>
    %cst_9 = arith.constant dense<0.000000e+00> : vector<16xf32>
    %22 = vector.multi_reduction <add>, %21, %cst_9 [1] : vector<16x32xf32> to vector<16xf32>
    %23 = vector.shape_cast %22 : vector<16xf32> to vector<16x1xf32>
    %cst_10 = arith.constant 1.000000e-24 : f32
    %24 = vector.broadcast %cst_10 : f32 to vector<16x1xf32>
    %25 = arith.maximumf %23, %24 : vector<16x1xf32>
    %26 = math.rsqrt %25 : vector<16x1xf32>
    %27 = vector.broadcast %26 : vector<16x1xf32> to vector<16x32xf32>
    %28 = arith.mulf %20, %27 : vector<16x32xf32>
    %29 = tpu.concatenate %28, %28 in 0 : vector<16x32xf32>, vector<16x32xf32> -> vector<32x32xf32>
    %30 = arith.mulf %18, %29 : vector<32x32xf32>
    %cst_11 = arith.constant dense<0.000000e+00> : vector<32xf32>
    %31 = vector.multi_reduction <add>, %30, %cst_11 [1] : vector<32x32xf32> to vector<32xf32>
    %32 = vector.shape_cast %31 : vector<32xf32> to vector<32x1xf32>
    %33 = vector.broadcast %32 : vector<32x1xf32> to vector<32x32xf32>
    %34 = arith.mulf %33, %29 : vector<32x32xf32>
    %35 = arith.subf %18, %34 : vector<32x32xf32>
    %36 = vector.extract_strided_slice %35 {offsets = [0, 0], sizes = [16, 32], strides = [1, 1]} : vector<32x32xf32> to vector<16x32xf32>
    %37 = vector.extract_strided_slice %35 {offsets = [16, 0], sizes = [16, 32], strides = [1, 1]} : vector<32x32xf32> to vector<16x32xf32>
    %38 = arith.addf %36, %19 : vector<16x32xf32>
    %39 = arith.subf %38, %37 : vector<16x32xf32>
    %40 = arith.mulf %39, %39 : vector<16x32xf32>
    %cst_12 = arith.constant dense<0.000000e+00> : vector<16xf32>
    %41 = vector.multi_reduction <add>, %40, %cst_12 [1] : vector<16x32xf32> to vector<16xf32>
    %42 = vector.shape_cast %41 : vector<16xf32> to vector<16x1xf32>
    %43 = math.sqrt %42 : vector<16x1xf32>
    %44 = vector.extract_strided_slice %43 {offsets = [0, 0], sizes = [8, 1], strides = [1, 1]} : vector<16x1xf32> to vector<8x1xf32>
    %45 = vector.extract_strided_slice %43 {offsets = [8, 0], sizes = [8, 1], strides = [1, 1]} : vector<16x1xf32> to vector<8x1xf32>
    %cst_13 = arith.constant 1.000000e+00 : f32
    %46 = vector.broadcast %cst_13 : f32 to vector<8x1xf32>
    %47 = arith.addf %46, %44 : vector<8x1xf32>
    %48 = arith.subf %47, %45 : vector<8x1xf32>
    %cst_14 = arith.constant 0.000000e+00 : f32
    %49 = vector.broadcast %cst_14 : f32 to vector<8x1xf32>
    %50 = arith.maximumf %48, %49 : vector<8x1xf32>
    %51 = vector.shape_cast %50 : vector<8x1xf32> to vector<1x8x1xf32>
    %cst_15 = arith.constant dense<0.000000e+00> : vector<1xf32>
    %52 = vector.multi_reduction <add>, %51, %cst_15 [1, 2] : vector<1x8x1xf32> to vector<1xf32>
    %53 = vector.shape_cast %52 : vector<1xf32> to vector<1x1x1xf32>
    %54 = vector.extract %53[0, 0, 0] : f32 from vector<1x1x1xf32>
    %cst_16 = arith.constant 1.250000e-01 : f32
    %55 = arith.mulf %54, %cst_16 : f32
    %56 = arith.mulf %2, %3 : vector<8x32xf32>
    %57 = arith.mulf %2, %2 : vector<8x32xf32>
    %58 = arith.mulf %3, %3 : vector<8x32xf32>
    %59 = tpu.concatenate %56, %57, %58 in 0 : vector<8x32xf32>, vector<8x32xf32>, vector<8x32xf32> -> vector<24x32xf32>
    %cst_17 = arith.constant dense<0.000000e+00> : vector<24xf32>
    %60 = vector.multi_reduction <add>, %59, %cst_17 [1] : vector<24x32xf32> to vector<24xf32>
    %61 = vector.shape_cast %60 : vector<24xf32> to vector<24x1xf32>
    %62 = vector.extract_strided_slice %61 {offsets = [0, 0], sizes = [8, 1], strides = [1, 1]} : vector<24x1xf32> to vector<8x1xf32>
    %63 = math.absf %62 : vector<8x1xf32>
    %64 = vector.extract_strided_slice %61 {offsets = [8, 0], sizes = [8, 1], strides = [1, 1]} : vector<24x1xf32> to vector<8x1xf32>
    %65 = vector.extract_strided_slice %61 {offsets = [16, 0], sizes = [8, 1], strides = [1, 1]} : vector<24x1xf32> to vector<8x1xf32>
    %66 = arith.mulf %64, %65 : vector<8x1xf32>
    %67 = math.rsqrt %66 : vector<8x1xf32>
    %68 = arith.mulf %63, %67 : vector<8x1xf32>
    %69 = vector.shape_cast %68 : vector<8x1xf32> to vector<1x8x1xf32>
    %cst_18 = arith.constant dense<0.000000e+00> : vector<1xf32>
    %70 = vector.multi_reduction <add>, %69, %cst_18 [1, 2] : vector<1x8x1xf32> to vector<1xf32>
    %71 = vector.shape_cast %70 : vector<1xf32> to vector<1x1x1xf32>
    %72 = vector.extract %71[0, 0, 0] : f32 from vector<1x1x1xf32>
    %cst_19 = arith.constant 1.000000e-01 : f32
    %73 = arith.mulf %cst_19, %72 : f32
    %74 = arith.addf %55, %73 : f32
    %c0_20 = arith.constant 0 : index
    %c0_21 = arith.constant 0 : index
    %75 = memref.load %arg4[%c0_20, %c0_21] : memref<1x1xf32, #tpu.memory_space<smem>>
    memref.store %74, %arg4[%c0_20, %c0_21] : memref<1x1xf32, #tpu.memory_space<smem>>
    return
  }
}

</mosaic_0001>

<llo_original>
// kernel: transh_forward.1
$region0: #{transh_forward.1}
  #allocation0 [shape = 'u32[]', space=smem, size = 0x4, offset = 0x4, fixed_abs, tag = 'smem constant byte address 0x4 - core index']
  #allocation1 [shape = 'u32[144,128]{1,0:T(1,128)}', space=vmem, size = 0x12000, scoped, tag = 'internal scratch']
  %s0 = inlined_call_operand.vmem [shape: s32[16,3], index: 0, kind: input, shape index: {}]
  %s1 = inlined_call_operand.vmem [shape: f32[32,32], index: 1, kind: input, shape index: {}]
  %s2 = inlined_call_operand.vmem [shape: f32[8,32], index: 2, kind: input, shape index: {}]
  %s3 = inlined_call_operand.vmem [shape: f32[8,32], index: 3, kind: input, shape index: {}]
  %s4 = inlined_call_operand.hbm [shape: f32[1,1], index: 4, kind: output, shape index: {}]
  %s5 = sld [smem:[#allocation0]]
  $region26: #{transh_forward.1} parent=0
    _
  %s7 = ssub.s32 1, %s5
  %s8 = scalar_select 0, %s7, %s5
  $region1: #{transh_forward.1} parent=0
    #allocation2 [shape = 'u8[512]{0}', space=smem, size = 0x200, scoped, tag = 'output window, operand 0, single buffered']
    #allocation3 [shape = 's32[1]{0}', space=sflag, size = 0x4, scoped, tag = 'scoped memory for transh_forward.1']
    %9 = vsyncpa [#allocation3], 0
    // Predicated region
    $region2: #{transh_forward.1} parent=1 // pred_check
      _
    $region3: #{transh_forward.1} parent=1 // pred_check_branch
      %11 = sbr.rel (0) target = $region5
    $region4: #{transh_forward.1} parent=1 // pred_region
      _
    $region5: #{transh_forward.1} parent=1 // pred_fallthru
      _
    // Predicated region
    $region6: #{transh_forward.1} parent=1 // pred_check
      _
    $region7: #{transh_forward.1} parent=1 // pred_check_branch
      %13 = sbr.rel (0) target = $region9
    $region8: #{transh_forward.1} parent=1 // pred_region
      _
    $region9: #{transh_forward.1} parent=1 // pred_fallthru
      _
    // Predicated region
    $region10: #{transh_forward.1} parent=1 // pred_check
      _
    $region11: #{transh_forward.1} parent=1 // pred_check_branch
      %15 = sbr.rel (0) target = $region13
    $region12: #{transh_forward.1} parent=1 // pred_region
      _
    $region13: #{transh_forward.1} parent=1 // pred_fallthru
      _
    // Predicated region
    $region14: #{transh_forward.1} parent=1 // pred_check
      _
    $region15: #{transh_forward.1} parent=1 // pred_check_branch
      %17 = sbr.rel (0) target = $region17
    $region16: #{transh_forward.1} parent=1 // pred_region
      _
    $region17: #{transh_forward.1} parent=1 // pred_fallthru
      _
    %v18 = vld [vmem:[%s0] sm:$0xff]
    %v19 = vld [vmem:[%s0 + $0x8] sm:$0xff]
    %v20 = vld [vmem:[%s1] sm:$0xff]
    %v21 = vld [vmem:[%s1 + $0x8] sm:$0xff]
    %v22 = vld [vmem:[%s1 + $0x10] sm:$0xff]
    %v23 = vld [vmem:[%s1 + $0x18] sm:$0xff]
    %v24 = vld [vmem:[%s2] sm:$0xff]
    %v25 = vld [vmem:[%s3] sm:$0xff]
    %26 = vrot.lane.b32.xlu0 %v18, 127
    %v27 = vpop.permute.xlu0 %26
    %28 = vrot.lane.b32.xlu0 %v19, 127
    %v29 = vpop.permute.xlu0 %28
    %v30 = vlaneseq
    %v31 = vand.u32 %v30, 127
    %32 = vset.pattern.permute.xlu0 0
    %33 = vperm.xlu0 %32, %v18
    %v34 = vpop.permute.xlu0 %33
    %35 = vset.pattern.permute.xlu0 0
    %36 = vperm.xlu0 %35, %v19
    %v37 = vpop.permute.xlu0 %36
    %38 = vset.pattern.permute.xlu0 0
    %39 = vperm.xlu0 %38, %v27
    %v40 = vpop.permute.xlu0 %39
    %41 = vset.pattern.permute.xlu0 0
    %42 = vperm.xlu0 %41, %v29
    %v43 = vpop.permute.xlu0 %42
    %vm44 = vcmp.eq.s32.totalorder %v34, %v31
    %vm45 = vcmp.eq.s32.totalorder %v37, %v31
    %vm46 = vcmp.eq.s32.totalorder %v40, %v31
    %vm47 = vcmp.eq.s32.totalorder %v43, %v31
    %v48 = vsel %vm44, 1, 0
    %v49 = vsel %vm45, 1, 0
    %v50 = vsel %vm46, 1, 0
    %v51 = vsel %vm47, 1, 0
    %v52 = vcvt.s32.f32 %v48
    %v53 = vcvt.s32.f32 %v49
    %v54 = vcvt.s32.f32 %v50
    %v55 = vcvt.s32.f32 %v51
    %56 = vset.pattern.permute.xlu0 2
    %57 = vperm.xlu0 %56, %v18
    %v58 = vpop.permute.xlu0 %57
    %59 = vset.pattern.permute.xlu0 2
    %60 = vperm.xlu0 %59, %v19
    %v61 = vpop.permute.xlu0 %60
    %vm62 = vcmp.eq.s32.totalorder %v58, %v31
    %vm63 = vcmp.eq.s32.totalorder %v61, %v31
    %v64 = vsel %vm62, 1, 0
    %v65 = vsel %vm63, 1, 0
    %v66 = vcvt.s32.f32 %v64
    %v67 = vcvt.s32.f32 %v65
    %vm68 = vcmask 261120
    %v70 = vsel %vm68, %v52, 0
    %v73 = vsel %vm68, %v53, 0
    %v76 = vsel %vm68, %v54, 0
    %v79 = vsel %vm68, %v55, 0
    %81 = vmatprep.subr.mxu0 0.0
    %82 = vmatpush1.msra.mxu0 %v20
    %83 = vmatprep.subr.mxu0 0.0
    %84 = vmatpush1.msra.mxu0 %v21
    %85 = vmatprep.subr.mxu0 0.0
    %86 = vmatpush1.msra.mxu0 %v22
    %87 = vmatprep.subr.mxu0 0.0
    %88 = vmatpush1.msra.mxu0 %v23
    %89 = vmatprep.subr.mxu0 0.0
    %90 = vmatpush1.msra.mxu0 0.0
    %91 = vmatprep.subr.mxu0 0.0
    %92 = vmatpush1.msra.mxu0 0.0
    %93 = vmatprep.subr.mxu0 0.0
    %94 = vmatpush1.msra.mxu0 0.0
    %95 = vmatprep.subr.mxu0 0.0
    %96 = vmatpush1.msra.mxu0 0.0
    %97 = vmatprep.subr.mxu0 0.0
    %98 = vmatpush1.msra.mxu0 0.0
    %99 = vmatprep.subr.mxu0 0.0
    %100 = vmatpush1.msra.mxu0 0.0
    %101 = vmatprep.subr.mxu0 0.0
    %102 = vmatpush1.msra.mxu0 0.0
    %103 = vmatprep.subr.mxu0 0.0
    %104 = vmatpush1.msra.mxu0 0.0
    %105 = vmatprep.subr.mxu0 0.0
    %106 = vmatpush1.msra.mxu0 0.0
    %107 = vmatprep.subr.mxu0 0.0
    %108 = vmatpush1.msra.mxu0 0.0
    %109 = vmatprep.subr.mxu0 0.0
    %110 = vmatpush1.msra.mxu0 0.0
    %111 = vmatprep.subr.mxu0 0.0
    %112 = vmatpush1.msra.mxu0 0.0
    %113 = vmatprep.subr.mxu0 0.0
    %114 = vmatpush1.msra.mxu0 0.0
    %115 = vmatprep.subr.mxu0 0.0
    %116 = vmatpush1.msra.mxu0 0.0
    %117 = vmatprep.subr.mxu0 0.0
    %118 = vmatpush1.msra.mxu0 0.0
    %119 = vmatprep.subr.mxu0 0.0
    %120 = vmatpush1.msra.mxu0 0.0
    %121 = vmatprep.subr.mxu0 0.0
    %122 = vmatpush1.msra.mxu0 0.0
    %123 = vmatprep.subr.mxu0 0.0
    %124 = vmatpush1.msra.mxu0 0.0
    %125 = vmatprep.subr.mxu0 0.0
    %126 = vmatpush1.msra.mxu0 0.0
    %127 = vmatprep.subr.mxu0 0.0
    %128 = vmatpush1.msra.mxu0 0.0
    %129 = vmatprep.subr.mxu0 0.0
    %130 = vmatpush1.msra.mxu0 0.0
    %131 = vmatprep.subr.mxu0 0.0
    %132 = vmatpush1.msra.mxu0 0.0
    %133 = vmatprep.subr.mxu0 0.0
    %134 = vmatpush1.msra.mxu0 0.0
    %135 = vmatprep.subr.mxu0 0.0
    %136 = vmatpush1.msra.mxu0 0.0
    %137 = vmatprep.subr.mxu0 0.0
    %138 = vmatpush1.msra.mxu0 0.0
    %139 = vmatprep.subr.mxu0 0.0
    %140 = vmatpush1.msra.mxu0 0.0
    %141 = vmatprep.subr.mxu0 0.0
    %142 = vmatpush1.msra.mxu0 0.0
    %143 = vmatprep.subr.mxu0 0.0
    %144 = vmatpush1.msra.mxu0 0.0
    %145 = vmatprep.mubr.f32.mxu0 0.0
    %146 = vmatmul.mubr.f32.gmra.mrb[0].mxu0 %v70
    %v147 = vpop.f32.mrb[0].mxu0
    %v148 = vadd.f32 0.0, %v147
    %v149 = vpop.f32.mrb[0].mxu0
    %150 = vmatprep.mubr.f32.mxu0 0.0
    %151 = vmatmul.mubr.f32.gmra.mrb[0].mxu0 %v73
    %v152 = vpop.f32.mrb[0].mxu0
    %v153 = vadd.f32 0.0, %v152
    %v154 = vpop.f32.mrb[0].mxu0
    %155 = vmatprep.mubr.f32.mxu0 0.0
    %156 = vmatmul.mubr.f32.gmra.mrb[0].mxu0 %v76
    %v157 = vpop.f32.mrb[0].mxu0
    %v158 = vadd.f32 0.0, %v157
    %v159 = vpop.f32.mrb[0].mxu0
    %160 = vmatprep.mubr.f32.mxu0 0.0
    %161 = vmatmul.mubr.f32.gmra.mrb[0].mxu0 %v79
    %v162 = vpop.f32.mrb[0].mxu0
    %v163 = vadd.f32 0.0, %v162
    %v164 = vpop.f32.mrb[0].mxu0
    %165 = vdwg.mxu0
    %vm166 = vcmask 64512
    %v168 = vsel %vm166, %v66, 0
    %v171 = vsel %vm166, %v67, 0
    %173 = vmatprep.subr.mxu0 0.0
    %174 = vmatpush1.msra.mxu0 %v24
    %175 = vmatprep.subr.mxu0 0.0
    %176 = vmatpush1.msra.mxu0 0.0
    %177 = vmatprep.subr.mxu0 0.0
    %178 = vmatpush1.msra.mxu0 0.0
    %179 = vmatprep.subr.mxu0 0.0
    %180 = vmatpush1.msra.mxu0 0.0
    %181 = vmatprep.subr.mxu0 0.0
    %182 = vmatpush1.msra.mxu0 0.0
    %183 = vmatprep.subr.mxu0 0.0
    %184 = vmatpush1.msra.mxu0 0.0
    %185 = vmatprep.subr.mxu0 0.0
    %186 = vmatpush1.msra.mxu0 0.0
    %187 = vmatprep.subr.mxu0 0.0
    %188 = vmatpush1.msra.mxu0 0.0
    %189 = vmatprep.subr.mxu0 0.0
    %190 = vmatpush1.msra.mxu0 0.0
    %191 = vmatprep.subr.mxu0 0.0
    %192 = vmatpush1.msra.mxu0 0.0
    %193 = vmatprep.subr.mxu0 0.0
    %194 = vmatpush1.msra.mxu0 0.0
    %195 = vmatprep.subr.mxu0 0.0
    %196 = vmatpush1.msra.mxu0 0.0
    %197 = vmatprep.subr.mxu0 0.0
    %198 = vmatpush1.msra.mxu0 0.0
    %199 = vmatprep.subr.mxu0 0.0
    %200 = vmatpush1.msra.mxu0 0.0
    %201 = vmatprep.subr.mxu0 0.0
    %202 = vmatpush1.msra.mxu0 0.0
    %203 = vmatprep.subr.mxu0 0.0
    %204 = vmatpush1.msra.mxu0 0.0
    %205 = vmatprep.subr.mxu0 0.0
    %206 = vmatpush1.msra.mxu0 0.0
    %207 = vmatprep.subr.mxu0 0.0
    %208 = vmatpush1.msra.mxu0 0.0
    %209 = vmatprep.subr.mxu0 0.0
    %210 = vmatpush1.msra.mxu0 0.0
    %211 = vmatprep.subr.mxu0 0.0
    %212 = vmatpush1.msra.mxu0 0.0
    %213 = vmatprep.subr.mxu0 0.0
    %214 = vmatpush1.msra.mxu0 0.0
    %215 = vmatprep.subr.mxu0 0.0
    %216 = vmatpush1.msra.mxu0 0.0
    %217 = vmatprep.subr.mxu0 0.0
    %218 = vmatpush1.msra.mxu0 0.0
    %219 = vmatprep.subr.mxu0 0.0
    %220 = vmatpush1.msra.mxu0 0.0
    %221 = vmatprep.subr.mxu0 0.0
    %222 = vmatpush1.msra.mxu0 0.0
    %223 = vmatprep.subr.mxu0 0.0
    %224 = vmatpush1.msra.mxu0 0.0
    %225 = vmatprep.subr.mxu0 0.0
    %226 = vmatpush1.msra.mxu0 0.0
    %227 = vmatprep.subr.mxu0 0.0
    %228 = vmatpush1.msra.mxu0 0.0
    %229 = vmatprep.subr.mxu0 0.0
    %230 = vmatpush1.msra.mxu0 0.0
    %231 = vmatprep.subr.mxu0 0.0
    %232 = vmatpush1.msra.mxu0 0.0
    %233 = vmatprep.subr.mxu0 0.0
    %234 = vmatpush1.msra.mxu0 0.0
    %235 = vmatprep.subr.mxu0 0.0
    %236 = vmatpush1.msra.mxu0 0.0
    %237 = vmatprep.mubr.f32.mxu0 0.0
    %238 = vmatmul.mubr.f32.gmra.mrb[0].mxu0 %v168
    %v239 = vpop.f32.mrb[0].mxu0
    %v240 = vadd.f32 0.0, %v239
    %v241 = vpop.f32.mrb[0].mxu0
    %242 = vmatprep.mubr.f32.mxu0 0.0
    %243 = vmatmul.mubr.f32.gmra.mrb[0].mxu0 %v171
    %v244 = vpop.f32.mrb[0].mxu0
    %v245 = vadd.f32 0.0, %v244
    %v246 = vpop.f32.mrb[0].mxu0
    %247 = vdwg.mxu0
    %248 = vmatprep.subr.mxu0 0.0
    %249 = vmatpush1.msra.mxu0 %v25
    %250 = vmatprep.subr.mxu0 0.0
    %251 = vmatpush1.msra.mxu0 0.0
    %252 = vmatprep.subr.mxu0 0.0
    %253 = vmatpush1.msra.mxu0 0.0
    %254 = vmatprep.subr.mxu0 0.0
    %255 = vmatpush1.msra.mxu0 0.0
    %256 = vmatprep.subr.mxu0 0.0
    %257 = vmatpush1.msra.mxu0 0.0
    %258 = vmatprep.subr.mxu0 0.0
    %259 = vmatpush1.msra.mxu0 0.0
    %260 = vmatprep.subr.mxu0 0.0
    %261 = vmatpush1.msra.mxu0 0.0
    %262 = vmatprep.subr.mxu0 0.0
    %263 = vmatpush1.msra.mxu0 0.0
    %264 = vmatprep.subr.mxu0 0.0
    %265 = vmatpush1.msra.mxu0 0.0
    %266 = vmatprep.subr.mxu0 0.0
    %267 = vmatpush1.msra.mxu0 0.0
    %268 = vmatprep.subr.mxu0 0.0
    %269 = vmatpush1.msra.mxu0 0.0
    %270 = vmatprep.subr.mxu0 0.0
    %271 = vmatpush1.msra.mxu0 0.0
    %272 = vmatprep.subr.mxu0 0.0
    %273 = vmatpush1.msra.mxu0 0.0
    %274 = vmatprep.subr.mxu0 0.0
    %275 = vmatpush1.msra.mxu0 0.0
    %276 = vmatprep.subr.mxu0 0.0
    %277 = vmatpush1.msra.mxu0 0.0
    %278 = vmatprep.subr.mxu0 0.0
    %279 = vmatpush1.msra.mxu0 0.0
    %280 = vmatprep.subr.mxu0 0.0
    %281 = vmatpush1.msra.mxu0 0.0
    %282 = vmatprep.subr.mxu0 0.0
    %283 = vmatpush1.msra.mxu0 0.0
    %284 = vmatprep.subr.mxu0 0.0
    %285 = vmatpush1.msra.mxu0 0.0
    %286 = vmatprep.subr.mxu0 0.0
    %287 = vmatpush1.msra.mxu0 0.0
    %288 = vmatprep.subr.mxu0 0.0
    %289 = vmatpush1.msra.mxu0 0.0
    %290 = vmatprep.subr.mxu0 0.0
    %291 = vmatpush1.msra.mxu0 0.0
    %292 = vmatprep.subr.mxu0 0.0
    %293 = vmatpush1.msra.mxu0 0.0
    %294 = vmatprep.subr.mxu0 0.0
    %295 = vmatpush1.msra.mxu0 0.0
    %296 = vmatprep.subr.mxu0 0.0
    %297 = vmatpush1.msra.mxu0 0.0
    %298 = vmatprep.subr.mxu0 0.0
    %299 = vmatpush1.msra.mxu0 0.0
    %300 = vmatprep.subr.mxu0 0.0
    %301 = vmatpush1.msra.mxu0 0.0
    %302 = vmatprep.subr.mxu0 0.0
    %303 = vmatpush1.msra.mxu0 0.0
    %304 = vmatprep.subr.mxu0 0.0
    %305 = vmatpush1.msra.mxu0 0.0
    %306 = vmatprep.subr.mxu0 0.0
    %307 = vmatpush1.msra.mxu0 0.0
    %308 = vmatprep.subr.mxu0 0.0
    %309 = vmatpush1.msra.mxu0 0.0
    %310 = vmatprep.subr.mxu0 0.0
    %311 = vmatpush1.msra.mxu0 0.0
    %312 = vmatprep.mubr.f32.mxu0 0.0
    %313 = vmatmul.mubr.f32.gmra.mrb[0].mxu0 %v168
    %v314 = vpop.f32.mrb[0].mxu0
    %v315 = vadd.f32 0.0, %v314
    %v316 = vpop.f32.mrb[0].mxu0
    %317 = vmatprep.mubr.f32.mxu0 0.0
    %318 = vmatmul.mubr.f32.gmra.mrb[0].mxu0 %v171
    %v319 = vpop.f32.mrb[0].mxu0
    %v320 = vadd.f32 0.0, %v319
    %v321 = vpop.f32.mrb[0].mxu0
    %322 = vdwg.mxu0
    %v323 = vmul.f32 %v315, %v315
    %v324 = vmul.f32 %v320, %v320
    %v325 = vsel %vm68, %v323, 0.0
    %326 = vadd.xlane.f32.xlu0 %v325
    %v327 = vpop.xlane.xlu0 %326
    %v328 = vsel %vm68, %v324, 0.0
    %329 = vadd.xlane.f32.xlu0 %v328
    %v330 = vpop.xlane.xlu0 %329
    %v331 = vmax.f32 %v327, 1e-24
    %v332 = vmax.f32 %v330, 1e-24
    %v333 = vrsqrt.pop %v331
    %v334 = vrsqrt.pop %v332
    %v335 = vmul.f32 %v315, %v333
    %v336 = vmul.f32 %v320, %v334
    %v337 = vmul.f32 %v148, %v335
    %v338 = vmul.f32 %v153, %v336
    %v339 = vmul.f32 %v158, %v335
    %v340 = vmul.f32 %v163, %v336
    %v341 = vsel %vm68, %v337, 0.0
    %342 = vadd.xlane.f32.xlu0 %v341
    %v343 = vpop.xlane.xlu0 %342
    %v344 = vsel %vm68, %v338, 0.0
    %345 = vadd.xlane.f32.xlu0 %v344
    %v346 = vpop.xlane.xlu0 %345
    %v347 = vsel %vm68, %v339, 0.0
    %348 = vadd.xlane.f32.xlu0 %v347
    %v349 = vpop.xlane.xlu0 %348
    %v350 = vsel %vm68, %v340, 0.0
    %351 = vadd.xlane.f32.xlu0 %v350
    %v352 = vpop.xlane.xlu0 %351
    %v353 = vmul.f32 %v343, %v335
    %v354 = vmul.f32 %v346, %v336
    %v355 = vmul.f32 %v349, %v335
    %v356 = vmul.f32 %v352, %v336
    %v357 = vsub.f32 %v148, %v353
    %v358 = vsub.f32 %v153, %v354
    %v359 = vsub.f32 %v158, %v355
    %v360 = vsub.f32 %v163, %v356
    %v361 = vadd.f32 %v357, %v240
    %v362 = vadd.f32 %v358, %v245
    %v363 = vsub.f32 %v361, %v359
    %v364 = vsub.f32 %v362, %v360
    %v365 = vmul.f32 %v363, %v363
    %v366 = vmul.f32 %v364, %v364
    %v367 = vsel %vm68, %v365, 0.0
    %368 = vadd.xlane.f32.xlu0 %v367
    %v369 = vpop.xlane.xlu0 %368
    %v370 = vsel %vm68, %v366, 0.0
    %371 = vadd.xlane.f32.xlu0 %v370
    %v372 = vpop.xlane.xlu0 %371
    %v373 = vrsqrt.pop %v369
    %v374 = vmul.f32 %v369, %v373
    %vm375 = vcmp.eq.f32.partialorder %v369, inf
    %v376 = vsel %vm375, %v369, %v374
    %vm377 = vcmp.eq.f32.partialorder %v369, 0.0
    %v378 = vand.u32 %v369, 2147483648
    %v379 = vsel %vm377, %v378, %v376
    %v380 = vrsqrt.pop %v372
    %v381 = vmul.f32 %v372, %v380
    %vm382 = vcmp.eq.f32.partialorder %v372, inf
    %v383 = vsel %vm382, %v372, %v381
    %vm384 = vcmp.eq.f32.partialorder %v372, 0.0
    %v385 = vand.u32 %v372, 2147483648
    %v386 = vsel %vm384, %v385, %v383
    %v387 = vadd.f32 %v379, 1.0
    %v388 = vsub.f32 %v387, %v386
    %v389 = vmax.f32 %v388, 0.0
    %vm390 = vcmask 7168
    %v391 = vsel %vm390, %v389, 0.0
    %392 = vadd.xlane.f32.xlu0 %v391
    %v393 = vpop.xlane.xlu0 %392
    %v394 = vrot.slane %v393, 4
    %v395 = vadd.f32 %v393, %v394
    %v396 = vrot.slane %v395, 2
    %v397 = vadd.f32 %v395, %v396
    %v398 = vrot.slane %v397, 1
    %v399 = vadd.f32 %v397, %v398
    %s400 = vtos %v399
    %s401 = smul.f32 %s400, 0.125
    %v402 = vmul.f32 %v24, %v25
    %v403 = vmul.f32 %v24, %v24
    %v404 = vmul.f32 %v25, %v25
    %v405 = vsel %vm68, %v402, 0.0
    %406 = vadd.xlane.f32.xlu0 %v405
    %v407 = vpop.xlane.xlu0 %406
    %v408 = vsel %vm68, %v403, 0.0
    %409 = vadd.xlane.f32.xlu0 %v408
    %v410 = vpop.xlane.xlu0 %409
    %v411 = vsel %vm68, %v404, 0.0
    %412 = vadd.xlane.f32.xlu0 %v411
    %v413 = vpop.xlane.xlu0 %412
    %v414 = vand.u32 2147483647, %v407
    %v415 = vmul.f32 %v410, %v413
    %v416 = vrsqrt.pop %v415
    %v417 = vmul.f32 %v414, %v416
    %v418 = vsel %vm390, %v417, 0.0
    %419 = vadd.xlane.f32.xlu0 %v418
    %v420 = vpop.xlane.xlu0 %419
    %v421 = vrot.slane %v420, 4
    %v422 = vadd.f32 %v420, %v421
    %v423 = vrot.slane %v422, 2
    %v424 = vadd.f32 %v422, %v423
    %v425 = vrot.slane %v424, 1
    %v426 = vadd.f32 %v424, %v425
    %s427 = vtos %v426
    %s428 = smul.f32 %s427, 0.1
    %s429 = sadd.f32 %s401, %s428
    %s430 = scalar_lea.smem [#allocation2], 0
    %431 = sst [smem:[%s430]] %s429
    // Predicated region
    $region18: #{transh_forward.1} parent=1 // pred_check
      _
    $region19: #{transh_forward.1} parent=1 // pred_check_branch
      %433 = sbr.rel (0) target = $region21
    $region20: #{transh_forward.1} parent=1 // pred_region
      %s435 = ssub.s32 16, 16
      %436 = vsyncadd [#allocation3], %s435
      %439 = dma.smem_to_hbm [#allocation2], 16, %s4, [#allocation3]
    $region21: #{transh_forward.1} parent=1 // pred_fallthru
      _
    // Predicated region
    $region22: #{transh_forward.1} parent=1 // pred_check
      _
    $region23: #{transh_forward.1} parent=1 // pred_check_branch
      %441 = sbr.rel (0) target = $region25
    $region24: #{transh_forward.1} parent=1 // pred_region
      %442 = dma.done [#allocation3], 16
    $region25: #{transh_forward.1} parent=1 // pred_fallthru
      _
    %443 = sfence
    %444 = vsyncpa [#allocation3], 1

</llo_original>
